<compile_context>
chip_gen: v6e
topology: v6e:2x2x1
jax: 0.10.0
libtpu: 0.0.40
codegen_flags: <defaults>
</compile_context>

<pallas_src>
import functools

import jax
import jax.numpy as jnp
from jax.experimental import pallas as pl
from jax.experimental.pallas import tpu as pltpu

IN_DIM = 50
HID_DIM = 200
OUT_DIM = 1250

# Lane-aligned padded feature dims (last-dim multiples of 128).
IN_PAD = 128
HID_PAD = 256
OUT_PAD = 1280


def _mlp_kernel(x_ref, w1_ref, b1_ref, w2_ref, b2_ref, o_ref):
    # Layer 1: Linear(IN_PAD -> HID_PAD) + ReLU.  bf16 MXU matmul, f32 accumulate.
    h = jnp.dot(x_ref[...], w1_ref[...], preferred_element_type=jnp.float32)
    h = jnp.maximum(h + b1_ref[...], 0.0)            # b1 is (1, HID_PAD) f32

    # Layer 2: Linear(HID_PAD -> OUT_PAD) + Sigmoid.  Cast activations back to
    # bf16 for the MXU; accumulate in f32.
    y = jnp.dot(h.astype(jnp.bfloat16), w2_ref[...],
                preferred_element_type=jnp.float32)
    y = y + b2_ref[...]                               # b2 is (1, OUT_PAD) f32

    # Exact sigmoid: exp runs on the EUP, the divide on the VPU — both have
    # slack (kernel is MXU/HBM bound), so exactness is free.
    s = 1.0 / (1.0 + jnp.exp(-y))

    # Store only the real 1250 output columns (output block last dim == full
    # array dim): 9 dense vregs + 1 masked vreg per row group.
    o_ref[...] = s[:, :OUT_DIM]


def pad_params(w1, b1, w2, b2):
    """Zero-pad (in, out)-layout params to lane-aligned shapes; weights in bf16."""
    w1p = jnp.zeros((IN_PAD, HID_PAD), jnp.bfloat16).at[:IN_DIM, :HID_DIM].set(
        w1.astype(jnp.bfloat16))
    b1p = jnp.zeros((1, HID_PAD), jnp.float32).at[:, :HID_DIM].set(b1)
    w2p = jnp.zeros((HID_PAD, OUT_PAD), jnp.bfloat16).at[:HID_DIM, :OUT_DIM].set(
        w2.astype(jnp.bfloat16))
    b2p = jnp.zeros((1, OUT_PAD), jnp.float32).at[:, :OUT_DIM].set(b2)
    return w1p, b1p, w2p, b2p


def _pick_batch_tile(B, block_b):
    """Adaptive batch tile: multiple of 8, <= block_b, <=12.5% padded-row waste."""
    b8 = max(8, ((B + 7) // 8) * 8)
    if b8 <= block_b:
        return b8                       # whole batch in a single grid step
    tb = block_b
    while tb > 8:
        b_pad = pl.cdiv(B, tb) * tb
        if 8 * (b_pad - B) <= b_pad:    # dead rows <= 12.5% of the padded batch
            return tb
        tb //= 2
    return 8


@functools.partial(jax.jit, static_argnames=("block_b",))
def simple2nn_forward(x, w1p, b1p, w2p, b2p, *, block_b=512):
    """x: (B, 50) f32, lane-padded params -> (B, 1250) f32."""
    B = x.shape[0]
    tb = _pick_batch_tile(B, block_b)
    b_pad = pl.cdiv(B, tb) * tb

    # Zero-pad batch rows / input features; zeros are inert through the MLP.
    # Input is cast to bf16 (MXU-native); accumulation in the kernel stays f32.
    xp = jnp.zeros((b_pad, IN_PAD), jnp.bfloat16).at[:B, :IN_DIM].set(
        x.astype(jnp.bfloat16))

    out = pl.pallas_call(
        _mlp_kernel,
        out_shape=jax.ShapeDtypeStruct((b_pad, OUT_DIM), jnp.float32),
        grid_spec=pltpu.PrefetchScalarGridSpec(
            num_scalar_prefetch=0,
            grid=(b_pad // tb,),
            in_specs=[
                # x tile streams over the batch grid (double-buffered).
                pl.BlockSpec((tb, IN_PAD), lambda i: (i, 0)),
                # Weights / biases: full-extent blocks with constant index_map
                # -> resident in VMEM across the whole grid (~0.72 MiB bf16).
                pl.BlockSpec((IN_PAD, HID_PAD), lambda i: (0, 0)),
                pl.BlockSpec((1, HID_PAD), lambda i: (0, 0)),
                pl.BlockSpec((HID_PAD, OUT_PAD), lambda i: (0, 0)),
                pl.BlockSpec((1, OUT_PAD), lambda i: (0, 0)),
            ],
            # Output block last dim equals the full array dim (1250) -> legal,
            # and the wrapper needs no lane slice afterwards.
            out_specs=pl.BlockSpec((tb, OUT_DIM), lambda i: (i, 0)),
        ),
        compiler_params=pltpu.CompilerParams(
            # Independent batch tiles: shard across TensorCores on v7x.
            dimension_semantics=("parallel",),
            # Headroom for large batch tiles (also raises v5e's 16 MiB default).
            vmem_limit_bytes=32 * 1024 * 1024,
        ),
    )(xp, w1p, b1p, w2p, b2p)

    # Only strip padded batch rows if any were added (no-op copy otherwise).
    return out if b_pad == B else out[:B]


def init_params(key):
    """Mirror PyTorch nn.Linear default init: U[-1/sqrt(fan_in), +1/sqrt(fan_in)]."""
    k1, k2, k3, k4 = jax.random.split(key, 4)
    lim1 = 1.0 / jnp.sqrt(jnp.float32(IN_DIM))
    lim2 = 1.0 / jnp.sqrt(jnp.float32(HID_DIM))
    # Stored as (in, out) so the kernel computes x @ W directly.
    w1 = jax.random.uniform(k1, (IN_DIM, HID_DIM), jnp.float32, -lim1, lim1)
    b1 = jax.random.uniform(k2, (1, HID_DIM), jnp.float32, -lim1, lim1)
    w2 = jax.random.uniform(k3, (HID_DIM, OUT_DIM), jnp.float32, -lim2, lim2)
    b2 = jax.random.uniform(k4, (1, OUT_DIM), jnp.float32, -lim2, lim2)
    return w1, b1, w2, b2


def reference_forward_f32(x, w1, b1, w2, b2):
    """Pure f32 forward — exact PyTorch-module semantics."""
    h = jnp.maximum(x @ w1 + b1, 0.0)
    return jax.nn.sigmoid(h @ w2 + b2)


def reference_forward_bf16(x, w1, b1, w2, b2):
    """Same bf16-input / f32-accumulate arithmetic the kernel performs."""
    xb = x.astype(jnp.bfloat16)
    w1b = w1.astype(jnp.bfloat16)
    w2b = w2.astype(jnp.bfloat16)
    h = jnp.maximum(
        jnp.dot(xb, w1b, preferred_element_type=jnp.float32) + b1, 0.0)
    y = jnp.dot(h.astype(jnp.bfloat16), w2b,
                preferred_element_type=jnp.float32) + b2
    return 1.0 / (1.0 + jnp.exp(-y))


if __name__ == "__main__":
    key = jax.random.PRNGKey(0)
    kx, kp = jax.random.split(key)

    B = 8
    x = jax.random.normal(kx, (B, IN_DIM), jnp.float32)
    w1, b1, w2, b2 = init_params(kp)
    w1p, b1p, w2p, b2p = pad_params(w1, b1, w2, b2)

    out = simple2nn_forward(x, w1p, b1p, w2p, b2p)
    out = jax.block_until_ready(out)
    assert out.shape == (B, OUT_DIM), out.shape

    # Check 1: against a reference doing the identical bf16-in / f32-accumulate
    # arithmetic — isolates kernel / tiling bugs from quantization.
    ref_bf16 = reference_forward_bf16(x, w1, b1, w2, b2)
    assert jnp.allclose(out, ref_bf16, atol=1e-4, rtol=1e-4), \
        "kernel mismatch vs bf16-arithmetic reference"

    # Check 2: against the exact f32 PyTorch-equivalent forward — bounds the
    # bf16 quantization error (f32 accumulation keeps it small; documented
    # deviation from the strict-f32 module).
    ref_f32 = reference_forward_f32(x, w1, b1, w2, b2)
    assert jnp.allclose(out, ref_f32, atol=3e-2, rtol=3e-2), \
        "bf16 quantization error larger than expected vs f32 reference"

    print("KERNEL_OK")
</pallas_src>

<mosaic_0001>
module attributes {stable_mosaic.version = 11 : i64} {
  func.func @_mlp_kernel(%arg0: i32, %arg1: memref<8x128xbf16, #tpu.memory_space<vmem>>, %arg2: memref<128x256xbf16, #tpu.memory_space<vmem>>, %arg3: memref<1x256xf32, #tpu.memory_space<vmem>>, %arg4: memref<256x1280xbf16, #tpu.memory_space<vmem>>, %arg5: memref<1x1280xf32, #tpu.memory_space<vmem>>, %arg6: memref<8x1250xf32, #tpu.memory_space<vmem>>) attributes {dimension_semantics = [#tpu.dimension_semantics<parallel>], iteration_bounds = array<i64: 1>, scalar_prefetch = 0 : i64, scratch_operands = 0 : i64, tpu.core_type = #tpu.core_type<tc>, window_params = [{transform_indices = @transform_0, window_bounds = array<i64: 8, 128>}, {pipeline_mode = #tpu.pipeline_mode<synchronous>, transform_indices = @transform_1, window_bounds = array<i64: 128, 256>}, {pipeline_mode = #tpu.pipeline_mode<synchronous>, transform_indices = @transform_2, window_bounds = array<i64: 1, 256>}, {pipeline_mode = #tpu.pipeline_mode<synchronous>, transform_indices = @transform_3, window_bounds = array<i64: 256, 1280>}, {pipeline_mode = #tpu.pipeline_mode<synchronous>, transform_indices = @transform_4, window_bounds = array<i64: 1, 1280>}, {transform_indices = @transform_5, window_bounds = array<i64: 8, 1250>}]} {
    %c0 = arith.constant 0 : index
    %c0_0 = arith.constant 0 : index
    %0 = vector.load %arg1[%c0, %c0_0] : memref<8x128xbf16, #tpu.memory_space<vmem>>, vector<8x128xbf16>
    %c0_1 = arith.constant 0 : index
    %c0_2 = arith.constant 0 : index
    %1 = vector.load %arg2[%c0_1, %c0_2] : memref<128x256xbf16, #tpu.memory_space<vmem>>, vector<128x256xbf16>
    %cst = arith.constant dense<0.000000e+00> : vector<8x256xf32>
    %2 = tpu.matmul %0, %1, %cst {dimension_numbers = #tpu.dot_dimension_numbers<[1], [0], [0], [1], [0, 0, 1, 1], [], []>} : vector<8x128xbf16>, vector<128x256xbf16>, vector<8x256xf32> -> vector<8x256xf32>
    %c0_3 = arith.constant 0 : index
    %c0_4 = arith.constant 0 : index
    %3 = vector.load %arg3[%c0_3, %c0_4] : memref<1x256xf32, #tpu.memory_space<vmem>>, vector<1x256xf32>
    %4 = vector.broadcast %3 : vector<1x256xf32> to vector<8x256xf32>
    %5 = arith.addf %2, %4 : vector<8x256xf32>
    %cst_5 = arith.constant 0.000000e+00 : f32
    %6 = vector.broadcast %cst_5 : f32 to vector<8x256xf32>
    %7 = arith.maximumf %5, %6 : vector<8x256xf32>
    %8 = arith.truncf %7 : vector<8x256xf32> to vector<8x256xbf16>
    %c0_6 = arith.constant 0 : index
    %c0_7 = arith.constant 0 : index
    %9 = vector.load %arg4[%c0_6, %c0_7] : memref<256x1280xbf16, #tpu.memory_space<vmem>>, vector<256x1280xbf16>
    %cst_8 = arith.constant dense<0.000000e+00> : vector<8x1280xf32>
    %10 = tpu.matmul %8, %9, %cst_8 {dimension_numbers = #tpu.dot_dimension_numbers<[1], [0], [0], [1], [0, 0, 1, 1], [], []>} : vector<8x256xbf16>, vector<256x1280xbf16>, vector<8x1280xf32> -> vector<8x1280xf32>
    %c0_9 = arith.constant 0 : index
    %c0_10 = arith.constant 0 : index
    %11 = vector.load %arg5[%c0_9, %c0_10] : memref<1x1280xf32, #tpu.memory_space<vmem>>, vector<1x1280xf32>
    %12 = vector.broadcast %11 : vector<1x1280xf32> to vector<8x1280xf32>
    %13 = arith.addf %10, %12 : vector<8x1280xf32>
    %cst_11 = arith.constant 0.000000e+00 : f32
    %14 = vector.broadcast %cst_11 : f32 to vector<8x1280xf32>
    %15 = arith.subf %14, %13 : vector<8x1280xf32>
    %16 = math.exp %15 : vector<8x1280xf32>
    %cst_12 = arith.constant 1.000000e+00 : f32
    %17 = vector.broadcast %cst_12 : f32 to vector<8x1280xf32>
    %18 = arith.addf %17, %16 : vector<8x1280xf32>
    %cst_13 = arith.constant 1.000000e+00 : f32
    %19 = vector.broadcast %cst_13 : f32 to vector<8x1280xf32>
    %20 = arith.divf %19, %18 : vector<8x1280xf32>
    %21 = vector.extract_strided_slice %20 {offsets = [0, 0], sizes = [8, 1250], strides = [1, 1]} : vector<8x1280xf32> to vector<8x1250xf32>
    %c0_14 = arith.constant 0 : index
    %c0_15 = arith.constant 0 : index
    %22 = vector.load %arg6[%c0_14, %c0_15] : memref<8x1250xf32, #tpu.memory_space<vmem>>, vector<8x1250xf32>
    tpu.vector_store %arg6[%c0_14, %c0_15], %21 {strides = array<i32>} : memref<8x1250xf32, #tpu.memory_space<vmem>>, vector<8x1250xf32>,
    return
  }
  func.func @transform_0(%arg0: i32) -> (i32, i32) {
    %c0_i32 = arith.constant 0 : i32
    %c0_i32_0 = arith.constant 0 : i32
    return %arg0, %c0_i32 : i32, i32
  }
  func.func @transform_1(%arg0: i32) -> (i32, i32) {
    %c0_i32 = arith.constant 0 : i32
    %c0_i32_0 = arith.constant 0 : i32
    %c0_i32_1 = arith.constant 0 : i32
    return %c0_i32, %c0_i32_0 : i32, i32
  }
  func.func @transform_2(%arg0: i32) -> (i32, i32) {
    %c0_i32 = arith.constant 0 : i32
    %c0_i32_0 = arith.constant 0 : i32
    %c0_i32_1 = arith.constant 0 : i32
    return %c0_i32, %c0_i32_0 : i32, i32
  }
  func.func @transform_3(%arg0: i32) -> (i32, i32) {
    %c0_i32 = arith.constant 0 : i32
    %c0_i32_0 = arith.constant 0 : i32
    %c0_i32_1 = arith.constant 0 : i32
    return %c0_i32, %c0_i32_0 : i32, i32
  }
  func.func @transform_4(%arg0: i32) -> (i32, i32) {
    %c0_i32 = arith.constant 0 : i32
    %c0_i32_0 = arith.constant 0 : i32
    %c0_i32_1 = arith.constant 0 : i32
    return %c0_i32, %c0_i32_0 : i32, i32
  }
  func.func @transform_5(%arg0: i32) -> (i32, i32) {
    %c0_i32 = arith.constant 0 : i32
    %c0_i32_0 = arith.constant 0 : i32
    return %arg0, %c0_i32 : i32, i32
  }
}

</mosaic_0001>

<llo_original>
// kernel: simple2nn_forward.1
$region0: #{simple2nn_forward.1}
  #allocation0 [shape = 'u32[]', space=smem, size = 0x4, offset = 0x4, fixed_abs, tag = 'smem constant byte address 0x4 - core index']
  #allocation1 [shape = 'u32[144,128]{1,0:T(1,128)}', space=vmem, size = 0x12000, scoped, tag = 'internal scratch']
  %s0 = inlined_call_operand.vmem [shape: bf16[8,128], index: 0, kind: input, shape index: {}]
  %s1 = inlined_call_operand.hbm [shape: bf16[128,256], index: 1, kind: input, shape index: {}]
  %s2 = inlined_call_operand.vmem [shape: f32[1,256], index: 2, kind: input, shape index: {}]
  %s3 = inlined_call_operand.hbm [shape: bf16[256,1280], index: 3, kind: input, shape index: {}]
  %s4 = inlined_call_operand.vmem [shape: f32[1,1280], index: 4, kind: input, shape index: {}]
  %s5 = inlined_call_operand.hbm [shape: f32[8,1250], index: 5, kind: output, shape index: {}]
  %s6 = sld [smem:[#allocation0]]
  $region38: #{simple2nn_forward.1} parent=0
    _
  %s8 = ssub.s32 1, %s6
  %s9 = scalar_select 0, %s8, %s6
  $region1: #{simple2nn_forward.1} parent=0
    #allocation2 [shape = 'u8[65536]{0}', space=vmem, size = 0x10000, scoped, tag = 'input window, operand 1, single buffered']
    #allocation3 [shape = 's32[1]{0}', space=sflag, size = 0x4, scoped, tag = 'scoped memory for simple2nn_forward.1']
    #allocation4 [shape = 's32[1]{0}', space=sflag, size = 0x4, scoped, tag = 'scoped memory for simple2nn_forward.1']
    #allocation5 [shape = 'u8[655360]{0}', space=vmem, size = 0xa0000, scoped, tag = 'input window, operand 3, single buffered']
    #allocation6 [shape = 's32[1]{0}', space=sflag, size = 0x4, scoped, tag = 'scoped memory for simple2nn_forward.1']
    #allocation7 [shape = 'u8[40960]{0}', space=vmem, size = 0xa000, scoped, tag = 'output window, operand 0, single buffered']
    %10 = vsyncpa [#allocation3], 0
    %11 = vsyncpa [#allocation6], 0
    %12 = vsyncpa [#allocation4], 0
    // Predicated region
    $region2: #{simple2nn_forward.1} parent=1 // pred_check
      _
    $region3: #{simple2nn_forward.1} parent=1 // pred_check_branch
      %14 = sbr.rel (0) target = $region5
    $region4: #{simple2nn_forward.1} parent=1 // pred_region
      _
    $region5: #{simple2nn_forward.1} parent=1 // pred_fallthru
      _
    // Predicated region
    $region6: #{simple2nn_forward.1} parent=1 // pred_check
      _
    $region7: #{simple2nn_forward.1} parent=1 // pred_check_branch
      %16 = sbr.rel (0) target = $region9
    $region8: #{simple2nn_forward.1} parent=1 // pred_region
      %s18 = ssub.s32 2048, 2048
      %19 = vsyncadd [#allocation3], %s18
      %s20 = sshll.u32 [#allocation2], 4
      %s21 = int_to_ptr.vmem [resolvable:$true] %s20
      %26 = dma.hbm_to_vmem [thread:$0]  %s1, 2048, %s21, [#allocation3], 128, 128, 8
    $region9: #{simple2nn_forward.1} parent=1 // pred_fallthru
      _
    // Predicated region
    $region10: #{simple2nn_forward.1} parent=1 // pred_check
      _
    $region11: #{simple2nn_forward.1} parent=1 // pred_check_branch
      %28 = sbr.rel (0) target = $region13
    $region12: #{simple2nn_forward.1} parent=1 // pred_region
      _
    $region13: #{simple2nn_forward.1} parent=1 // pred_fallthru
      _
    // Predicated region
    $region14: #{simple2nn_forward.1} parent=1 // pred_check
      _
    $region15: #{simple2nn_forward.1} parent=1 // pred_check_branch
      %30 = sbr.rel (0) target = $region17
    $region16: #{simple2nn_forward.1} parent=1 // pred_region
      %s32 = ssub.s32 20480, 20480
      %33 = vsyncadd [#allocation6], %s32
      %s34 = sshll.u32 [#allocation5], 4
      %s35 = int_to_ptr.vmem [resolvable:$true] %s34
      %40 = dma.hbm_to_vmem [thread:$0]  %s3, 20480, %s35, [#allocation6], 640, 640, 40
    $region17: #{simple2nn_forward.1} parent=1 // pred_fallthru
      _
    // Predicated region
    $region18: #{simple2nn_forward.1} parent=1 // pred_check
      _
    $region19: #{simple2nn_forward.1} parent=1 // pred_check_branch
      %42 = sbr.rel (0) target = $region21
    $region20: #{simple2nn_forward.1} parent=1 // pred_region
      _
    $region21: #{simple2nn_forward.1} parent=1 // pred_fallthru
      _
    // Predicated region
    $region22: #{simple2nn_forward.1} parent=1 // pred_check
      _
    $region23: #{simple2nn_forward.1} parent=1 // pred_check_branch
      %44 = sbr.rel (0) target = $region25
    $region24: #{simple2nn_forward.1} parent=1 // pred_region
      %45 = dma.done [#allocation3], 2048
    $region25: #{simple2nn_forward.1} parent=1 // pred_fallthru
      _
    // Predicated region
    $region26: #{simple2nn_forward.1} parent=1 // pred_check
      _
    $region27: #{simple2nn_forward.1} parent=1 // pred_check_branch
      %47 = sbr.rel (0) target = $region29
    $region28: #{simple2nn_forward.1} parent=1 // pred_region
      %48 = dma.done [#allocation6], 20480
    $region29: #{simple2nn_forward.1} parent=1 // pred_fallthru
      _
    %v50 = vld [vmem:[%s0] sm:$0xf]
    %v51 = vld [vmem:[#allocation2] sm:$0xff]
    %v52 = vld [vmem:[#allocation2 + $0x8] sm:$0xff]
    %v53 = vld [vmem:[#allocation2 + $0x10] sm:$0xff]
    %v54 = vld [vmem:[#allocation2 + $0x18] sm:$0xff]
    %v55 = vld [vmem:[#allocation2 + $0x20] sm:$0xff]
    %v56 = vld [vmem:[#allocation2 + $0x28] sm:$0xff]
    %v57 = vld [vmem:[#allocation2 + $0x30] sm:$0xff]
    %v58 = vld [vmem:[#allocation2 + $0x38] sm:$0xff]
    %v59 = vld [vmem:[#allocation2 + $0x40] sm:$0xff]
    %v60 = vld [vmem:[#allocation2 + $0x48] sm:$0xff]
    %v61 = vld [vmem:[#allocation2 + $0x50] sm:$0xff]
    %v62 = vld [vmem:[#allocation2 + $0x58] sm:$0xff]
    %v63 = vld [vmem:[#allocation2 + $0x60] sm:$0xff]
    %v64 = vld [vmem:[#allocation2 + $0x68] sm:$0xff]
    %v65 = vld [vmem:[#allocation2 + $0x70] sm:$0xff]
    %v66 = vld [vmem:[#allocation2 + $0x78] sm:$0xff]
    %v67 = vld [vmem:[%s2] sm:$0x3]
    %v69 = vlaneseq
    %v70 = vshrl.u32 %v69, 7
    %v71 = vsub.s32 0, %v70
    %v72 = vrot.slane %v67, %v71
    %v73 = vlaneseq
    %v74 = vshrl.u32 %v73, 7
    %v75 = vsub.s32 1, %v74
    %v76 = vrot.slane %v67, %v75
    %v95 = vunpack.c.l.b16 %v51
    %v96 = vunpack.c.h.b16 %v51
    %v97 = vunpack.c.l.b16 %v52
    %v98 = vunpack.c.h.b16 %v52
    %v99 = vunpack.c.l.b16 %v53
    %v100 = vunpack.c.h.b16 %v53
    %v101 = vunpack.c.l.b16 %v54
    %v102 = vunpack.c.h.b16 %v54
    %v103 = vunpack.c.l.b16 %v55
    %v104 = vunpack.c.h.b16 %v55
    %v105 = vunpack.c.l.b16 %v56
    %v106 = vunpack.c.h.b16 %v56
    %v107 = vunpack.c.l.b16 %v57
    %v108 = vunpack.c.h.b16 %v57
    %v109 = vunpack.c.l.b16 %v58
    %v110 = vunpack.c.h.b16 %v58
    %v111 = vunpack.c.l.b16 %v59
    %v112 = vunpack.c.h.b16 %v59
    %v113 = vunpack.c.l.b16 %v60
    %v114 = vunpack.c.h.b16 %v60
    %v115 = vunpack.c.l.b16 %v61
    %v116 = vunpack.c.h.b16 %v61
    %v117 = vunpack.c.l.b16 %v62
    %v118 = vunpack.c.h.b16 %v62
    %v119 = vunpack.c.l.b16 %v63
    %v120 = vunpack.c.h.b16 %v63
    %v121 = vunpack.c.l.b16 %v64
    %v122 = vunpack.c.h.b16 %v64
    %v123 = vunpack.c.l.b16 %v65
    %v124 = vunpack.c.h.b16 %v65
    %v125 = vunpack.c.l.b16 %v66
    %v126 = vunpack.c.h.b16 %v66
    %v127 = vpack.c.b16 %v97, %v95
    %v128 = vpack.c.b16 %v98, %v96
    %v129 = vpack.c.b16 %v101, %v99
    %v130 = vpack.c.b16 %v102, %v100
    %v131 = vpack.c.b16 %v105, %v103
    %v132 = vpack.c.b16 %v106, %v104
    %v133 = vpack.c.b16 %v109, %v107
    %v134 = vpack.c.b16 %v110, %v108
    %v135 = vpack.c.b16 %v113, %v111
    %v136 = vpack.c.b16 %v114, %v112
    %v137 = vpack.c.b16 %v117, %v115
    %v138 = vpack.c.b16 %v118, %v116
    %v139 = vpack.c.b16 %v121, %v119
    %v140 = vpack.c.b16 %v122, %v120
    %v141 = vpack.c.b16 %v125, %v123
    %v142 = vpack.c.b16 %v126, %v124
    %159 = vmatprep.subr.bf16.mxu0 %v142
    %160 = vmatpush1.bf16.msra.mxu0 %v141
    %161 = vmatprep.subr.bf16.mxu0 %v140
    %162 = vmatpush1.bf16.msra.mxu0 %v139
    %163 = vmatprep.subr.bf16.mxu0 %v138
    %164 = vmatpush1.bf16.msra.mxu0 %v137
    %165 = vmatprep.subr.bf16.mxu0 %v136
    %166 = vmatpush1.bf16.msra.mxu0 %v135
    %167 = vmatprep.subr.bf16.mxu0 %v134
    %168 = vmatpush1.bf16.msra.mxu0 %v133
    %169 = vmatprep.subr.bf16.mxu0 %v132
    %170 = vmatpush1.bf16.msra.mxu0 %v131
    %171 = vmatprep.subr.bf16.mxu0 %v130
    %172 = vmatpush1.bf16.msra.mxu0 %v129
    %173 = vmatprep.subr.bf16.mxu0 %v128
    %174 = vmatpush1.bf16.msra.mxu0 %v127
    %175 = vmatprep.subr.bf16.mxu0 0
    %176 = vmatpush2.bf16.msra.mxu0 0
    %177 = vmatprep.subr.bf16.mxu0 0
    %178 = vmatpush2.bf16.msra.mxu0 0
    %179 = vmatprep.subr.bf16.mxu0 0
    %180 = vmatpush2.bf16.msra.mxu0 0
    %181 = vmatprep.subr.bf16.mxu0 0
    %182 = vmatpush2.bf16.msra.mxu0 0
    %183 = vmatprep.subr.bf16.mxu0 0
    %184 = vmatpush2.bf16.msra.mxu0 0
    %185 = vmatprep.subr.bf16.mxu0 0
    %186 = vmatpush2.bf16.msra.mxu0 0
    %187 = vmatprep.subr.bf16.mxu0 0
    %188 = vmatpush2.bf16.msra.mxu0 0
    %189 = vmatprep.subr.bf16.mxu0 0
    %190 = vmatpush2.bf16.msra.mxu0 0
    %191 = vmatprep.mubr.bf16.mxu0 0
    %192 = vmatmul.mubr.bf16.gmra.mxu0 %v50
    %v193 = vpop.f32.mrf.mxu0
    %v194 = vadd.f32 %v72, %v193
    %v195 = vpop.f32.mrf.mxu0
    %v196 = vadd.f32 %v76, %v195
    %v197 = vpop.f32.mrf.mxu0
    %v198 = vpop.f32.mrf.mxu0
    %199 = vdwg.mxu0
    %v200 = vmax.f32 %v194, 0.0
    %v201 = vmax.f32 %v196, 0.0
    %v202 = vpack.c.bf16 %v200, %v200
    %v203 = vpack.c.bf16 %v201, %v201
    %v204 = vld [vmem:[#allocation5] sm:$0xff]
    %v205 = vld [vmem:[#allocation5 + $0x8] sm:$0xff]
    %v206 = vld [vmem:[#allocation5 + $0x10] sm:$0xff]
    %v207 = vld [vmem:[#allocation5 + $0x18] sm:$0xff]
    %v208 = vld [vmem:[#allocation5 + $0x20] sm:$0xff]
    %v209 = vld [vmem:[#allocation5 + $0x28] sm:$0xff]
    %v210 = vld [vmem:[#allocation5 + $0x30] sm:$0xff]
    %v211 = vld [vmem:[#allocation5 + $0x38] sm:$0xff]
    %v212 = vld [vmem:[#allocation5 + $0x40] sm:$0xff]
    %v213 = vld [vmem:[#allocation5 + $0x48] sm:$0xff]
    %v214 = vld [vmem:[#allocation5 + $0x50] sm:$0xff]
    %v215 = vld [vmem:[#allocation5 + $0x58] sm:$0xff]
    %v216 = vld [vmem:[#allocation5 + $0x60] sm:$0xff]
    %v217 = vld [vmem:[#allocation5 + $0x68] sm:$0xff]
    %v218 = vld [vmem:[#allocation5 + $0x70] sm:$0xff]
    %v219 = vld [vmem:[#allocation5 + $0x78] sm:$0xff]
    %v220 = vld [vmem:[#allocation5 + $0x80] sm:$0xff]
    %v221 = vld [vmem:[#allocation5 + $0x88] sm:$0xff]
    %v222 = vld [vmem:[#allocation5 + $0x90] sm:$0xff]
    %v223 = vld [vmem:[#allocation5 + $0x98] sm:$0xff]
    %v224 = vld [vmem:[#allocation5 + $0xa0] sm:$0xff]
    %v225 = vld [vmem:[#allocation5 + $0xa8] sm:$0xff]
    %v226 = vld [vmem:[#allocation5 + $0xb0] sm:$0xff]
    %v227 = vld [vmem:[#allocation5 + $0xb8] sm:$0xff]
    %v228 = vld [vmem:[#allocation5 + $0xc0] sm:$0xff]
    %v229 = vld [vmem:[#allocation5 + $0xc8] sm:$0xff]
    %v230 = vld [vmem:[#allocation5 + $0xd0] sm:$0xff]
    %v231 = vld [vmem:[#allocation5 + $0xd8] sm:$0xff]
    %v232 = vld [vmem:[#allocation5 + $0xe0] sm:$0xff]
    %v233 = vld [vmem:[#allocation5 + $0xe8] sm:$0xff]
    %v234 = vld [vmem:[#allocation5 + $0xf0] sm:$0xff]
    %v235 = vld [vmem:[#allocation5 + $0xf8] sm:$0xff]
    %v236 = vld [vmem:[#allocation5 + $0x100] sm:$0xff]
    %v237 = vld [vmem:[#allocation5 + $0x108] sm:$0xff]
    %v238 = vld [vmem:[#allocation5 + $0x110] sm:$0xff]
    %v239 = vld [vmem:[#allocation5 + $0x118] sm:$0xff]
    %v240 = vld [vmem:[#allocation5 + $0x120] sm:$0xff]
    %v241 = vld [vmem:[#allocation5 + $0x128] sm:$0xff]
    %v242 = vld [vmem:[#allocation5 + $0x130] sm:$0xff]
    %v243 = vld [vmem:[#allocation5 + $0x138] sm:$0xff]
    %v244 = vld [vmem:[#allocation5 + $0x140] sm:$0xff]
    %v245 = vld [vmem:[#allocation5 + $0x148] sm:$0xff]
    %v246 = vld [vmem:[#allocation5 + $0x150] sm:$0xff]
    %v247 = vld [vmem:[#allocation5 + $0x158] sm:$0xff]
    %v248 = vld [vmem:[#allocation5 + $0x160] sm:$0xff]
    %v249 = vld [vmem:[#allocation5 + $0x168] sm:$0xff]
    %v250 = vld [vmem:[#allocation5 + $0x170] sm:$0xff]
    %v251 = vld [vmem:[#allocation5 + $0x178] sm:$0xff]
    %v252 = vld [vmem:[#allocation5 + $0x180] sm:$0xff]
    %v253 = vld [vmem:[#allocation5 + $0x188] sm:$0xff]
    %v254 = vld [vmem:[#allocation5 + $0x190] sm:$0xff]
    %v255 = vld [vmem:[#allocation5 + $0x198] sm:$0xff]
    %v256 = vld [vmem:[#allocation5 + $0x1a0] sm:$0xff]
    %v257 = vld [vmem:[#allocation5 + $0x1a8] sm:$0xff]
    %v258 = vld [vmem:[#allocation5 + $0x1b0] sm:$0xff]
    %v259 = vld [vmem:[#allocation5 + $0x1b8] sm:$0xff]
    %v260 = vld [vmem:[#allocation5 + $0x1c0] sm:$0xff]
    %v261 = vld [vmem:[#allocation5 + $0x1c8] sm:$0xff]
    %v262 = vld [vmem:[#allocation5 + $0x1d0] sm:$0xff]
    %v263 = vld [vmem:[#allocation5 + $0x1d8] sm:$0xff]
    %v264 = vld [vmem:[#allocation5 + $0x1e0] sm:$0xff]
    %v265 = vld [vmem:[#allocation5 + $0x1e8] sm:$0xff]
    %v266 = vld [vmem:[#allocation5 + $0x1f0] sm:$0xff]
    %v267 = vld [vmem:[#allocation5 + $0x1f8] sm:$0xff]
    %v268 = vld [vmem:[#allocation5 + $0x200] sm:$0xff]
    %v269 = vld [vmem:[#allocation5 + $0x208] sm:$0xff]
    %v270 = vld [vmem:[#allocation5 + $0x210] sm:$0xff]
    %v271 = vld [vmem:[#allocation5 + $0x218] sm:$0xff]
    %v272 = vld [vmem:[#allocation5 + $0x220] sm:$0xff]
    %v273 = vld [vmem:[#allocation5 + $0x228] sm:$0xff]
    %v274 = vld [vmem:[#allocation5 + $0x230] sm:$0xff]
    %v275 = vld [vmem:[#allocation5 + $0x238] sm:$0xff]
    %v276 = vld [vmem:[#allocation5 + $0x240] sm:$0xff]
    %v277 = vld [vmem:[#allocation5 + $0x248] sm:$0xff]
    %v278 = vld [vmem:[#allocation5 + $0x250] sm:$0xff]
    %v279 = vld [vmem:[#allocation5 + $0x258] sm:$0xff]
    %v280 = vld [vmem:[#allocation5 + $0x260] sm:$0xff]
    %v281 = vld [vmem:[#allocation5 + $0x268] sm:$0xff]
    %v282 = vld [vmem:[#allocation5 + $0x270] sm:$0xff]
    %v283 = vld [vmem:[#allocation5 + $0x278] sm:$0xff]
    %v284 = vld [vmem:[#allocation5 + $0x280] sm:$0xff]
    %v285 = vld [vmem:[#allocation5 + $0x288] sm:$0xff]
    %v286 = vld [vmem:[#allocation5 + $0x290] sm:$0xff]
    %v287 = vld [vmem:[#allocation5 + $0x298] sm:$0xff]
    %v288 = vld [vmem:[#allocation5 + $0x2a0] sm:$0xff]
    %v289 = vld [vmem:[#allocation5 + $0x2a8] sm:$0xff]
    %v290 = vld [vmem:[#allocation5 + $0x2b0] sm:$0xff]
    %v291 = vld [vmem:[#allocation5 + $0x2b8] sm:$0xff]
    %v292 = vld [vmem:[#allocation5 + $0x2c0] sm:$0xff]
    %v293 = vld [vmem:[#allocation5 + $0x2c8] sm:$0xff]
    %v294 = vld [vmem:[#allocation5 + $0x2d0] sm:$0xff]
    %v295 = vld [vmem:[#allocation5 + $0x2d8] sm:$0xff]
    %v296 = vld [vmem:[#allocation5 + $0x2e0] sm:$0xff]
    %v297 = vld [vmem:[#allocation5 + $0x2e8] sm:$0xff]
    %v298 = vld [vmem:[#allocation5 + $0x2f0] sm:$0xff]
    %v299 = vld [vmem:[#allocation5 + $0x2f8] sm:$0xff]
    %v300 = vld [vmem:[#allocation5 + $0x300] sm:$0xff]
    %v301 = vld [vmem:[#allocation5 + $0x308] sm:$0xff]
    %v302 = vld [vmem:[#allocation5 + $0x310] sm:$0xff]
    %v303 = vld [vmem:[#allocation5 + $0x318] sm:$0xff]
    %v304 = vld [vmem:[#allocation5 + $0x320] sm:$0xff]
    %v305 = vld [vmem:[#allocation5 + $0x328] sm:$0xff]
    %v306 = vld [vmem:[#allocation5 + $0x330] sm:$0xff]
    %v307 = vld [vmem:[#allocation5 + $0x338] sm:$0xff]
    %v308 = vld [vmem:[#allocation5 + $0x340] sm:$0xff]
    %v309 = vld [vmem:[#allocation5 + $0x348] sm:$0xff]
    %v310 = vld [vmem:[#allocation5 + $0x350] sm:$0xff]
    %v311 = vld [vmem:[#allocation5 + $0x358] sm:$0xff]
    %v312 = vld [vmem:[#allocation5 + $0x360] sm:$0xff]
    %v313 = vld [vmem:[#allocation5 + $0x368] sm:$0xff]
    %v314 = vld [vmem:[#allocation5 + $0x370] sm:$0xff]
    %v315 = vld [vmem:[#allocation5 + $0x378] sm:$0xff]
    %v316 = vld [vmem:[#allocation5 + $0x380] sm:$0xff]
    %v317 = vld [vmem:[#allocation5 + $0x388] sm:$0xff]
    %v318 = vld [vmem:[#allocation5 + $0x390] sm:$0xff]
    %v319 = vld [vmem:[#allocation5 + $0x398] sm:$0xff]
    %v320 = vld [vmem:[#allocation5 + $0x3a0] sm:$0xff]
    %v321 = vld [vmem:[#allocation5 + $0x3a8] sm:$0xff]
    %v322 = vld [vmem:[#allocation5 + $0x3b0] sm:$0xff]
    %v323 = vld [vmem:[#allocation5 + $0x3b8] sm:$0xff]
    %v324 = vld [vmem:[#allocation5 + $0x3c0] sm:$0xff]
    %v325 = vld [vmem:[#allocation5 + $0x3c8] sm:$0xff]
    %v326 = vld [vmem:[#allocation5 + $0x3d0] sm:$0xff]
    %v327 = vld [vmem:[#allocation5 + $0x3d8] sm:$0xff]
    %v328 = vld [vmem:[#allocation5 + $0x3e0] sm:$0xff]
    %v329 = vld [vmem:[#allocation5 + $0x3e8] sm:$0xff]
    %v330 = vld [vmem:[#allocation5 + $0x3f0] sm:$0xff]
    %v331 = vld [vmem:[#allocation5 + $0x3f8] sm:$0xff]
    %v332 = vld [vmem:[#allocation5 + $0x400] sm:$0xff]
    %v333 = vld [vmem:[#allocation5 + $0x408] sm:$0xff]
    %v334 = vld [vmem:[#allocation5 + $0x410] sm:$0xff]
    %v335 = vld [vmem:[#allocation5 + $0x418] sm:$0xff]
    %v336 = vld [vmem:[#allocation5 + $0x420] sm:$0xff]
    %v337 = vld [vmem:[#allocation5 + $0x428] sm:$0xff]
    %v338 = vld [vmem:[#allocation5 + $0x430] sm:$0xff]
    %v339 = vld [vmem:[#allocation5 + $0x438] sm:$0xff]
    %v340 = vld [vmem:[#allocation5 + $0x440] sm:$0xff]
    %v341 = vld [vmem:[#allocation5 + $0x448] sm:$0xff]
    %v342 = vld [vmem:[#allocation5 + $0x450] sm:$0xff]
    %v343 = vld [vmem:[#allocation5 + $0x458] sm:$0xff]
    %v344 = vld [vmem:[#allocation5 + $0x460] sm:$0xff]
    %v345 = vld [vmem:[#allocation5 + $0x468] sm:$0xff]
    %v346 = vld [vmem:[#allocation5 + $0x470] sm:$0xff]
    %v347 = vld [vmem:[#allocation5 + $0x478] sm:$0xff]
    %v348 = vld [vmem:[#allocation5 + $0x480] sm:$0xff]
    %v349 = vld [vmem:[#allocation5 + $0x488] sm:$0xff]
    %v350 = vld [vmem:[#allocation5 + $0x490] sm:$0xff]
    %v351 = vld [vmem:[#allocation5 + $0x498] sm:$0xff]
    %v352 = vld [vmem:[#allocation5 + $0x4a0] sm:$0xff]
    %v353 = vld [vmem:[#allocation5 + $0x4a8] sm:$0xff]
    %v354 = vld [vmem:[#allocation5 + $0x4b0] sm:$0xff]
    %v355 = vld [vmem:[#allocation5 + $0x4b8] sm:$0xff]
    %v356 = vld [vmem:[#allocation5 + $0x4c0] sm:$0xff]
    %v357 = vld [vmem:[#allocation5 + $0x4c8] sm:$0xff]
    %v358 = vld [vmem:[#allocation5 + $0x4d0] sm:$0xff]
    %v359 = vld [vmem:[#allocation5 + $0x4d8] sm:$0xff]
    %v360 = vld [vmem:[#allocation5 + $0x4e0] sm:$0xff]
    %v361 = vld [vmem:[#allocation5 + $0x4e8] sm:$0xff]
    %v362 = vld [vmem:[#allocation5 + $0x4f0] sm:$0xff]
    %v363 = vld [vmem:[#allocation5 + $0x4f8] sm:$0xff]
    %v364 = vld [vmem:[%s4] sm:$0xff]
    %v365 = vld [vmem:[%s4 + $0x8] sm:$0x3]
    %v368 = vlaneseq
    %v369 = vshrl.u32 %v368, 7
    %v370 = vsub.s32 0, %v369
    %v371 = vrot.slane %v364, %v370
    %v372 = vlaneseq
    %v373 = vshrl.u32 %v372, 7
    %v374 = vsub.s32 1, %v373
    %v375 = vrot.slane %v364, %v374
    %v376 = vlaneseq
    %v377 = vshrl.u32 %v376, 7
    %v378 = vsub.s32 2, %v377
    %v379 = vrot.slane %v364, %v378
    %v380 = vlaneseq
    %v381 = vshrl.u32 %v380, 7
    %v382 = vsub.s32 3, %v381
    %v383 = vrot.slane %v364, %v382
    %v384 = vlaneseq
    %v385 = vshrl.u32 %v384, 7
    %v386 = vsub.s32 4, %v385
    %v387 = vrot.slane %v364, %v386
    %v388 = vlaneseq
    %v389 = vshrl.u32 %v388, 7
    %v390 = vsub.s32 5, %v389
    %v391 = vrot.slane %v364, %v390
    %v392 = vlaneseq
    %v393 = vshrl.u32 %v392, 7
    %v394 = vsub.s32 6, %v393
    %v395 = vrot.slane %v364, %v394
    %v396 = vlaneseq
    %v397 = vshrl.u32 %v396, 7
    %v398 = vsub.s32 7, %v397
    %v399 = vrot.slane %v364, %v398
    %v400 = vlaneseq
    %v401 = vshrl.u32 %v400, 7
    %v402 = vsub.s32 0, %v401
    %v403 = vrot.slane %v365, %v402
    %v404 = vlaneseq
    %v405 = vshrl.u32 %v404, 7
    %v406 = vsub.s32 1, %v405
    %v407 = vrot.slane %v365, %v406
    %v578 = vunpack.c.l.b16 %v204
    %v579 = vunpack.c.h.b16 %v204
    %v580 = vunpack.c.l.b16 %v205
    %v581 = vunpack.c.h.b16 %v205
    %v582 = vunpack.c.l.b16 %v206
    %v583 = vunpack.c.h.b16 %v206
    %v584 = vunpack.c.l.b16 %v207
    %v585 = vunpack.c.h.b16 %v207
    %v586 = vunpack.c.l.b16 %v208
    %v587 = vunpack.c.h.b16 %v208
    %v588 = vunpack.c.l.b16 %v209
    %v589 = vunpack.c.h.b16 %v209
    %v590 = vunpack.c.l.b16 %v210
    %v591 = vunpack.c.h.b16 %v210
    %v592 = vunpack.c.l.b16 %v211
    %v593 = vunpack.c.h.b16 %v211
    %v594 = vunpack.c.l.b16 %v212
    %v595 = vunpack.c.h.b16 %v212
    %v596 = vunpack.c.l.b16 %v213
    %v597 = vunpack.c.h.b16 %v213
    %v598 = vunpack.c.l.b16 %v214
    %v599 = vunpack.c.h.b16 %v214
    %v600 = vunpack.c.l.b16 %v215
    %v601 = vunpack.c.h.b16 %v215
    %v602 = vunpack.c.l.b16 %v216
    %v603 = vunpack.c.h.b16 %v216
    %v604 = vunpack.c.l.b16 %v217
    %v605 = vunpack.c.h.b16 %v217
    %v606 = vunpack.c.l.b16 %v218
    %v607 = vunpack.c.h.b16 %v218
    %v608 = vunpack.c.l.b16 %v219
    %v609 = vunpack.c.h.b16 %v219
    %v610 = vunpack.c.l.b16 %v220
    %v611 = vunpack.c.h.b16 %v220
    %v612 = vunpack.c.l.b16 %v221
    %v613 = vunpack.c.h.b16 %v221
    %v614 = vunpack.c.l.b16 %v222
    %v615 = vunpack.c.h.b16 %v222
    %v616 = vunpack.c.l.b16 %v223
    %v617 = vunpack.c.h.b16 %v223
    %v618 = vunpack.c.l.b16 %v224
    %v619 = vunpack.c.h.b16 %v224
    %v620 = vunpack.c.l.b16 %v225
    %v621 = vunpack.c.h.b16 %v225
    %v622 = vunpack.c.l.b16 %v226
    %v623 = vunpack.c.h.b16 %v226
    %v624 = vunpack.c.l.b16 %v227
    %v625 = vunpack.c.h.b16 %v227
    %v626 = vunpack.c.l.b16 %v228
    %v627 = vunpack.c.h.b16 %v228
    %v628 = vunpack.c.l.b16 %v229
    %v629 = vunpack.c.h.b16 %v229
    %v630 = vunpack.c.l.b16 %v230
    %v631 = vunpack.c.h.b16 %v230
    %v632 = vunpack.c.l.b16 %v231
    %v633 = vunpack.c.h.b16 %v231
    %v634 = vunpack.c.l.b16 %v232
    %v635 = vunpack.c.h.b16 %v232
    %v636 = vunpack.c.l.b16 %v233
    %v637 = vunpack.c.h.b16 %v233
    %v638 = vunpack.c.l.b16 %v234
    %v639 = vunpack.c.h.b16 %v234
    %v640 = vunpack.c.l.b16 %v235
    %v641 = vunpack.c.h.b16 %v235
    %v642 = vunpack.c.l.b16 %v236
    %v643 = vunpack.c.h.b16 %v236
    %v644 = vunpack.c.l.b16 %v237
    %v645 = vunpack.c.h.b16 %v237
    %v646 = vunpack.c.l.b16 %v238
    %v647 = vunpack.c.h.b16 %v238
    %v648 = vunpack.c.l.b16 %v239
    %v649 = vunpack.c.h.b16 %v239
    %v650 = vunpack.c.l.b16 %v240
    %v651 = vunpack.c.h.b16 %v240
    %v652 = vunpack.c.l.b16 %v241
    %v653 = vunpack.c.h.b16 %v241
    %v654 = vunpack.c.l.b16 %v242
    %v655 = vunpack.c.h.b16 %v242
    %v656 = vunpack.c.l.b16 %v243
    %v657 = vunpack.c.h.b16 %v243
    %v658 = vunpack.c.l.b16 %v244
    %v659 = vunpack.c.h.b16 %v244
    %v660 = vunpack.c.l.b16 %v245
    %v661 = vunpack.c.h.b16 %v245
    %v662 = vunpack.c.l.b16 %v246
    %v663 = vunpack.c.h.b16 %v246
    %v664 = vunpack.c.l.b16 %v247
    %v665 = vunpack.c.h.b16 %v247
    %v666 = vunpack.c.l.b16 %v248
    %v667 = vunpack.c.h.b16 %v248
    %v668 = vunpack.c.l.b16 %v249
    %v669 = vunpack.c.h.b16 %v249
    %v670 = vunpack.c.l.b16 %v250
    %v671 = vunpack.c.h.b16 %v250
    %v672 = vunpack.c.l.b16 %v251
    %v673 = vunpack.c.h.b16 %v251
    %v674 = vunpack.c.l.b16 %v252
    %v675 = vunpack.c.h.b16 %v252
    %v676 = vunpack.c.l.b16 %v253
    %v677 = vunpack.c.h.b16 %v253
    %v678 = vunpack.c.l.b16 %v254
    %v679 = vunpack.c.h.b16 %v254
    %v680 = vunpack.c.l.b16 %v255
    %v681 = vunpack.c.h.b16 %v255
    %v682 = vunpack.c.l.b16 %v256
    %v683 = vunpack.c.h.b16 %v256
    %v684 = vunpack.c.l.b16 %v257
    %v685 = vunpack.c.h.b16 %v257
    %v686 = vunpack.c.l.b16 %v258
    %v687 = vunpack.c.h.b16 %v258
    %v688 = vunpack.c.l.b16 %v259
    %v689 = vunpack.c.h.b16 %v259
    %v690 = vunpack.c.l.b16 %v260
    %v691 = vunpack.c.h.b16 %v260
    %v692 = vunpack.c.l.b16 %v261
    %v693 = vunpack.c.h.b16 %v261
    %v694 = vunpack.c.l.b16 %v262
    %v695 = vunpack.c.h.b16 %v262
    %v696 = vunpack.c.l.b16 %v263
    %v697 = vunpack.c.h.b16 %v263
    %v698 = vunpack.c.l.b16 %v264
    %v699 = vunpack.c.h.b16 %v264
    %v700 = vunpack.c.l.b16 %v265
    %v701 = vunpack.c.h.b16 %v265
    %v702 = vunpack.c.l.b16 %v266
    %v703 = vunpack.c.h.b16 %v266
    %v704 = vunpack.c.l.b16 %v267
    %v705 = vunpack.c.h.b16 %v267
    %v706 = vunpack.c.l.b16 %v268
    %v707 = vunpack.c.h.b16 %v268
    %v708 = vunpack.c.l.b16 %v269
    %v709 = vunpack.c.h.b16 %v269
    %v710 = vunpack.c.l.b16 %v270
    %v711 = vunpack.c.h.b16 %v270
    %v712 = vunpack.c.l.b16 %v271
    %v713 = vunpack.c.h.b16 %v271
    %v714 = vunpack.c.l.b16 %v272
    %v715 = vunpack.c.h.b16 %v272
    %v716 = vunpack.c.l.b16 %v273
    %v717 = vunpack.c.h.b16 %v273
    %v718 = vunpack.c.l.b16 %v274
    %v719 = vunpack.c.h.b16 %v274
    %v720 = vunpack.c.l.b16 %v275
    %v721 = vunpack.c.h.b16 %v275
    %v722 = vunpack.c.l.b16 %v276
    %v723 = vunpack.c.h.b16 %v276
    %v724 = vunpack.c.l.b16 %v277
    %v725 = vunpack.c.h.b16 %v277
    %v726 = vunpack.c.l.b16 %v278
    %v727 = vunpack.c.h.b16 %v278
    %v728 = vunpack.c.l.b16 %v279
    %v729 = vunpack.c.h.b16 %v279
    %v730 = vunpack.c.l.b16 %v280
    %v731 = vunpack.c.h.b16 %v280
    %v732 = vunpack.c.l.b16 %v281
    %v733 = vunpack.c.h.b16 %v281
    %v734 = vunpack.c.l.b16 %v282
    %v735 = vunpack.c.h.b16 %v282
    %v736 = vunpack.c.l.b16 %v283
    %v737 = vunpack.c.h.b16 %v283
    %v738 = vunpack.c.l.b16 %v284
    %v739 = vunpack.c.h.b16 %v284
    %v740 = vunpack.c.l.b16 %v285
    %v741 = vunpack.c.h.b16 %v285
    %v742 = vunpack.c.l.b16 %v286
    %v743 = vunpack.c.h.b16 %v286
    %v744 = vunpack.c.l.b16 %v287
    %v745 = vunpack.c.h.b16 %v287
    %v746 = vunpack.c.l.b16 %v288
    %v747 = vunpack.c.h.b16 %v288
    %v748 = vunpack.c.l.b16 %v289
    %v749 = vunpack.c.h.b16 %v289
    %v750 = vunpack.c.l.b16 %v290
    %v751 = vunpack.c.h.b16 %v290
    %v752 = vunpack.c.l.b16 %v291
    %v753 = vunpack.c.h.b16 %v291
    %v754 = vunpack.c.l.b16 %v292
    %v755 = vunpack.c.h.b16 %v292
    %v756 = vunpack.c.l.b16 %v293
    %v757 = vunpack.c.h.b16 %v293
    %v758 = vunpack.c.l.b16 %v294
    %v759 = vunpack.c.h.b16 %v294
    %v760 = vunpack.c.l.b16 %v295
    %v761 = vunpack.c.h.b16 %v295
    %v762 = vunpack.c.l.b16 %v296
    %v763 = vunpack.c.h.b16 %v296
    %v764 = vunpack.c.l.b16 %v297
    %v765 = vunpack.c.h.b16 %v297
    %v766 = vunpack.c.l.b16 %v298
    %v767 = vunpack.c.h.b16 %v298
    %v768 = vunpack.c.l.b16 %v299
    %v769 = vunpack.c.h.b16 %v299
    %v770 = vunpack.c.l.b16 %v300
    %v771 = vunpack.c.h.b16 %v300
    %v772 = vunpack.c.l.b16 %v301
    %v773 = vunpack.c.h.b16 %v301
    %v774 = vunpack.c.l.b16 %v302
    %v775 = vunpack.c.h.b16 %v302
    %v776 = vunpack.c.l.b16 %v303
    %v777 = vunpack.c.h.b16 %v303
    %v778 = vunpack.c.l.b16 %v304
    %v779 = vunpack.c.h.b16 %v304
    %v780 = vunpack.c.l.b16 %v305
    %v781 = vunpack.c.h.b16 %v305
    %v782 = vunpack.c.l.b16 %v306
    %v783 = vunpack.c.h.b16 %v306
    %v784 = vunpack.c.l.b16 %v307
    %v785 = vunpack.c.h.b16 %v307
    %v786 = vunpack.c.l.b16 %v308
    %v787 = vunpack.c.h.b16 %v308
    %v788 = vunpack.c.l.b16 %v309
    %v789 = vunpack.c.h.b16 %v309
    %v790 = vunpack.c.l.b16 %v310
    %v791 = vunpack.c.h.b16 %v310
    %v792 = vunpack.c.l.b16 %v311
    %v793 = vunpack.c.h.b16 %v311
    %v794 = vunpack.c.l.b16 %v312
    %v795 = vunpack.c.h.b16 %v312
    %v796 = vunpack.c.l.b16 %v313
    %v797 = vunpack.c.h.b16 %v313
    %v798 = vunpack.c.l.b16 %v314
    %v799 = vunpack.c.h.b16 %v314
    %v800 = vunpack.c.l.b16 %v315
    %v801 = vunpack.c.h.b16 %v315
    %v802 = vunpack.c.l.b16 %v316
    %v803 = vunpack.c.h.b16 %v316
    %v804 = vunpack.c.l.b16 %v317
    %v805 = vunpack.c.h.b16 %v317
    %v806 = vunpack.c.l.b16 %v318
    %v807 = vunpack.c.h.b16 %v318
    %v808 = vunpack.c.l.b16 %v319
    %v809 = vunpack.c.h.b16 %v319
    %v810 = vunpack.c.l.b16 %v320
    %v811 = vunpack.c.h.b16 %v320
    %v812 = vunpack.c.l.b16 %v321
    %v813 = vunpack.c.h.b16 %v321
    %v814 = vunpack.c.l.b16 %v322
    %v815 = vunpack.c.h.b16 %v322
    %v816 = vunpack.c.l.b16 %v323
    %v817 = vunpack.c.h.b16 %v323
    %v818 = vunpack.c.l.b16 %v324
    %v819 = vunpack.c.h.b16 %v324
    %v820 = vunpack.c.l.b16 %v325
    %v821 = vunpack.c.h.b16 %v325
    %v822 = vunpack.c.l.b16 %v326
    %v823 = vunpack.c.h.b16 %v326
    %v824 = vunpack.c.l.b16 %v327
    %v825 = vunpack.c.h.b16 %v327
    %v826 = vunpack.c.l.b16 %v328
    %v827 = vunpack.c.h.b16 %v328
    %v828 = vunpack.c.l.b16 %v329
    %v829 = vunpack.c.h.b16 %v329
    %v830 = vunpack.c.l.b16 %v330
    %v831 = vunpack.c.h.b16 %v330
    %v832 = vunpack.c.l.b16 %v331
    %v833 = vunpack.c.h.b16 %v331
    %v834 = vunpack.c.l.b16 %v332
    %v835 = vunpack.c.h.b16 %v332
    %v836 = vunpack.c.l.b16 %v333
    %v837 = vunpack.c.h.b16 %v333
    %v838 = vunpack.c.l.b16 %v334
    %v839 = vunpack.c.h.b16 %v334
    %v840 = vunpack.c.l.b16 %v335
    %v841 = vunpack.c.h.b16 %v335
    %v842 = vunpack.c.l.b16 %v336
    %v843 = vunpack.c.h.b16 %v336
    %v844 = vunpack.c.l.b16 %v337
    %v845 = vunpack.c.h.b16 %v337
    %v846 = vunpack.c.l.b16 %v338
    %v847 = vunpack.c.h.b16 %v338
    %v848 = vunpack.c.l.b16 %v339
    %v849 = vunpack.c.h.b16 %v339
    %v850 = vunpack.c.l.b16 %v340
    %v851 = vunpack.c.h.b16 %v340
    %v852 = vunpack.c.l.b16 %v341
    %v853 = vunpack.c.h.b16 %v341
    %v854 = vunpack.c.l.b16 %v342
    %v855 = vunpack.c.h.b16 %v342
    %v856 = vunpack.c.l.b16 %v343
    %v857 = vunpack.c.h.b16 %v343
    %v858 = vunpack.c.l.b16 %v344
    %v859 = vunpack.c.h.b16 %v344
    %v860 = vunpack.c.l.b16 %v345
    %v861 = vunpack.c.h.b16 %v345
    %v862 = vunpack.c.l.b16 %v346
    %v863 = vunpack.c.h.b16 %v346
    %v864 = vunpack.c.l.b16 %v347
    %v865 = vunpack.c.h.b16 %v347
    %v866 = vunpack.c.l.b16 %v348
    %v867 = vunpack.c.h.b16 %v348
    %v868 = vunpack.c.l.b16 %v349
    %v869 = vunpack.c.h.b16 %v349
    %v870 = vunpack.c.l.b16 %v350
    %v871 = vunpack.c.h.b16 %v350
    %v872 = vunpack.c.l.b16 %v351
    %v873 = vunpack.c.h.b16 %v351
    %v874 = vunpack.c.l.b16 %v352
    %v875 = vunpack.c.h.b16 %v352
    %v876 = vunpack.c.l.b16 %v353
    %v877 = vunpack.c.h.b16 %v353
    %v878 = vunpack.c.l.b16 %v354
    %v879 = vunpack.c.h.b16 %v354
    %v880 = vunpack.c.l.b16 %v355
    %v881 = vunpack.c.h.b16 %v355
    %v882 = vunpack.c.l.b16 %v356
    %v883 = vunpack.c.h.b16 %v356
    %v884 = vunpack.c.l.b16 %v357
    %v885 = vunpack.c.h.b16 %v357
    %v886 = vunpack.c.l.b16 %v358
    %v887 = vunpack.c.h.b16 %v358
    %v888 = vunpack.c.l.b16 %v359
    %v889 = vunpack.c.h.b16 %v359
    %v890 = vunpack.c.l.b16 %v360
    %v891 = vunpack.c.h.b16 %v360
    %v892 = vunpack.c.l.b16 %v361
    %v893 = vunpack.c.h.b16 %v361
    %v894 = vunpack.c.l.b16 %v362
    %v895 = vunpack.c.h.b16 %v362
    %v896 = vunpack.c.l.b16 %v363
    %v897 = vunpack.c.h.b16 %v363
    %v898 = vpack.c.b16 %v588, %v578
    %v899 = vpack.c.b16 %v589, %v579
    %v900 = vpack.c.b16 %v590, %v580
    %v901 = vpack.c.b16 %v591, %v581
    %v902 = vpack.c.b16 %v592, %v582
    %v903 = vpack.c.b16 %v593, %v583
    %v904 = vpack.c.b16 %v594, %v584
    %v905 = vpack.c.b16 %v595, %v585
    %v906 = vpack.c.b16 %v596, %v586
    %v907 = vpack.c.b16 %v597, %v587
    %v908 = vpack.c.b16 %v608, %v598
    %v909 = vpack.c.b16 %v609, %v599
    %v910 = vpack.c.b16 %v610, %v600
    %v911 = vpack.c.b16 %v611, %v601
    %v912 = vpack.c.b16 %v612, %v602
    %v913 = vpack.c.b16 %v613, %v603
    %v914 = vpack.c.b16 %v614, %v604
    %v915 = vpack.c.b16 %v615, %v605
    %v916 = vpack.c.b16 %v616, %v606
    %v917 = vpack.c.b16 %v617, %v607
    %v918 = vpack.c.b16 %v628, %v618
    %v919 = vpack.c.b16 %v629, %v619
    %v920 = vpack.c.b16 %v630, %v620
    %v921 = vpack.c.b16 %v631, %v621
    %v922 = vpack.c.b16 %v632, %v622
    %v923 = vpack.c.b16 %v633, %v623
    %v924 = vpack.c.b16 %v634, %v624
    %v925 = vpack.c.b16 %v635, %v625
    %v926 = vpack.c.b16 %v636, %v626
    %v927 = vpack.c.b16 %v637, %v627
    %v928 = vpack.c.b16 %v648, %v638
    %v929 = vpack.c.b16 %v649, %v639
    %v930 = vpack.c.b16 %v650, %v640
    %v931 = vpack.c.b16 %v651, %v641
    %v932 = vpack.c.b16 %v652, %v642
    %v933 = vpack.c.b16 %v653, %v643
    %v934 = vpack.c.b16 %v654, %v644
    %v935 = vpack.c.b16 %v655, %v645
    %v936 = vpack.c.b16 %v656, %v646
    %v937 = vpack.c.b16 %v657, %v647
    %v938 = vpack.c.b16 %v668, %v658
    %v939 = vpack.c.b16 %v669, %v659
    %v940 = vpack.c.b16 %v670, %v660
    %v941 = vpack.c.b16 %v671, %v661
    %v942 = vpack.c.b16 %v672, %v662
    %v943 = vpack.c.b16 %v673, %v663
    %v944 = vpack.c.b16 %v674, %v664
    %v945 = vpack.c.b16 %v675, %v665
    %v946 = vpack.c.b16 %v676, %v666
    %v947 = vpack.c.b16 %v677, %v667
    %v948 = vpack.c.b16 %v688, %v678
    %v949 = vpack.c.b16 %v689, %v679
    %v950 = vpack.c.b16 %v690, %v680
    %v951 = vpack.c.b16 %v691, %v681
    %v952 = vpack.c.b16 %v692, %v682
    %v953 = vpack.c.b16 %v693, %v683
    %v954 = vpack.c.b16 %v694, %v684
    %v955 = vpack.c.b16 %v695, %v685
    %v956 = vpack.c.b16 %v696, %v686
    %v957 = vpack.c.b16 %v697, %v687
    %v958 = vpack.c.b16 %v708, %v698
    %v959 = vpack.c.b16 %v709, %v699
    %v960 = vpack.c.b16 %v710, %v700
    %v961 = vpack.c.b16 %v711, %v701
    %v962 = vpack.c.b16 %v712, %v702
    %v963 = vpack.c.b16 %v713, %v703
    %v964 = vpack.c.b16 %v714, %v704
    %v965 = vpack.c.b16 %v715, %v705
    %v966 = vpack.c.b16 %v716, %v706
    %v967 = vpack.c.b16 %v717, %v707
    %v968 = vpack.c.b16 %v728, %v718
    %v969 = vpack.c.b16 %v729, %v719
    %v970 = vpack.c.b16 %v730, %v720
    %v971 = vpack.c.b16 %v731, %v721
    %v972 = vpack.c.b16 %v732, %v722
    %v973 = vpack.c.b16 %v733, %v723
    %v974 = vpack.c.b16 %v734, %v724
    %v975 = vpack.c.b16 %v735, %v725
    %v976 = vpack.c.b16 %v736, %v726
    %v977 = vpack.c.b16 %v737, %v727
    %v978 = vpack.c.b16 %v748, %v738
    %v979 = vpack.c.b16 %v749, %v739
    %v980 = vpack.c.b16 %v750, %v740
    %v981 = vpack.c.b16 %v751, %v741
    %v982 = vpack.c.b16 %v752, %v742
    %v983 = vpack.c.b16 %v753, %v743
    %v984 = vpack.c.b16 %v754, %v744
    %v985 = vpack.c.b16 %v755, %v745
    %v986 = vpack.c.b16 %v756, %v746
    %v987 = vpack.c.b16 %v757, %v747
    %v988 = vpack.c.b16 %v768, %v758
    %v989 = vpack.c.b16 %v769, %v759
    %v990 = vpack.c.b16 %v770, %v760
    %v991 = vpack.c.b16 %v771, %v761
    %v992 = vpack.c.b16 %v772, %v762
    %v993 = vpack.c.b16 %v773, %v763
    %v994 = vpack.c.b16 %v774, %v764
    %v995 = vpack.c.b16 %v775, %v765
    %v996 = vpack.c.b16 %v776, %v766
    %v997 = vpack.c.b16 %v777, %v767
    %v998 = vpack.c.b16 %v788, %v778
    %v999 = vpack.c.b16 %v789, %v779
    %v1000 = vpack.c.b16 %v790, %v780
    %v1001 = vpack.c.b16 %v791, %v781
    %v1002 = vpack.c.b16 %v792, %v782
    %v1003 = vpack.c.b16 %v793, %v783
    %v1004 = vpack.c.b16 %v794, %v784
    %v1005 = vpack.c.b16 %v795, %v785
    %v1006 = vpack.c.b16 %v796, %v786
    %v1007 = vpack.c.b16 %v797, %v787
    %v1008 = vpack.c.b16 %v808, %v798
    %v1009 = vpack.c.b16 %v809, %v799
    %v1010 = vpack.c.b16 %v810, %v800
    %v1011 = vpack.c.b16 %v811, %v801
    %v1012 = vpack.c.b16 %v812, %v802
    %v1013 = vpack.c.b16 %v813, %v803
    %v1014 = vpack.c.b16 %v814, %v804
    %v1015 = vpack.c.b16 %v815, %v805
    %v1016 = vpack.c.b16 %v816, %v806
    %v1017 = vpack.c.b16 %v817, %v807
    %v1018 = vpack.c.b16 %v828, %v818
    %v1019 = vpack.c.b16 %v829, %v819
    %v1020 = vpack.c.b16 %v830, %v820
    %v1021 = vpack.c.b16 %v831, %v821
    %v1022 = vpack.c.b16 %v832, %v822
    %v1023 = vpack.c.b16 %v833, %v823
    %v1024 = vpack.c.b16 %v834, %v824
    %v1025 = vpack.c.b16 %v835, %v825
    %v1026 = vpack.c.b16 %v836, %v826
    %v1027 = vpack.c.b16 %v837, %v827
    %v1028 = vpack.c.b16 %v848, %v838
    %v1029 = vpack.c.b16 %v849, %v839
    %v1030 = vpack.c.b16 %v850, %v840
    %v1031 = vpack.c.b16 %v851, %v841
    %v1032 = vpack.c.b16 %v852, %v842
    %v1033 = vpack.c.b16 %v853, %v843
    %v1034 = vpack.c.b16 %v854, %v844
    %v1035 = vpack.c.b16 %v855, %v845
    %v1036 = vpack.c.b16 %v856, %v846
    %v1037 = vpack.c.b16 %v857, %v847
    %v1038 = vpack.c.b16 %v868, %v858
    %v1039 = vpack.c.b16 %v869, %v859
    %v1040 = vpack.c.b16 %v870, %v860
    %v1041 = vpack.c.b16 %v871, %v861
    %v1042 = vpack.c.b16 %v872, %v862
    %v1043 = vpack.c.b16 %v873, %v863
    %v1044 = vpack.c.b16 %v874, %v864
    %v1045 = vpack.c.b16 %v875, %v865
    %v1046 = vpack.c.b16 %v876, %v866
    %v1047 = vpack.c.b16 %v877, %v867
    %v1048 = vpack.c.b16 %v888, %v878
    %v1049 = vpack.c.b16 %v889, %v879
    %v1050 = vpack.c.b16 %v890, %v880
    %v1051 = vpack.c.b16 %v891, %v881
    %v1052 = vpack.c.b16 %v892, %v882
    %v1053 = vpack.c.b16 %v893, %v883
    %v1054 = vpack.c.b16 %v894, %v884
    %v1055 = vpack.c.b16 %v895, %v885
    %v1056 = vpack.c.b16 %v896, %v886
    %v1057 = vpack.c.b16 %v897, %v887
    %1218 = vmatprep.subr.bf16.mxu0 %v969
    %1219 = vmatpush1.bf16.msra.mxu0 %v968
    %1220 = vmatprep.subr.bf16.mxu0 %v959
    %1221 = vmatpush1.bf16.msra.mxu0 %v958
    %1222 = vmatprep.subr.bf16.mxu0 %v949
    %1223 = vmatpush1.bf16.msra.mxu0 %v948
    %1224 = vmatprep.subr.bf16.mxu0 %v939
    %1225 = vmatpush1.bf16.msra.mxu0 %v938
    %1226 = vmatprep.subr.bf16.mxu0 %v929
    %1227 = vmatpush1.bf16.msra.mxu0 %v928
    %1228 = vmatprep.subr.bf16.mxu0 %v919
    %1229 = vmatpush1.bf16.msra.mxu0 %v918
    %1230 = vmatprep.subr.bf16.mxu0 %v909
    %1231 = vmatpush1.bf16.msra.mxu0 %v908
    %1232 = vmatprep.subr.bf16.mxu0 %v899
    %1233 = vmatpush1.bf16.msra.mxu0 %v898
    %1234 = vmatprep.subr.bf16.mxu0 %v1049
    %1235 = vmatpush2.bf16.msra.mxu0 %v1048
    %1236 = vmatprep.subr.bf16.mxu0 %v1039
    %1237 = vmatpush2.bf16.msra.mxu0 %v1038
    %1238 = vmatprep.subr.bf16.mxu0 %v1029
    %1239 = vmatpush2.bf16.msra.mxu0 %v1028
    %1240 = vmatprep.subr.bf16.mxu0 %v1019
    %1241 = vmatpush2.bf16.msra.mxu0 %v1018
    %1242 = vmatprep.subr.bf16.mxu0 %v1009
    %1243 = vmatpush2.bf16.msra.mxu0 %v1008
    %1244 = vmatprep.subr.bf16.mxu0 %v999
    %1245 = vmatpush2.bf16.msra.mxu0 %v998
    %1246 = vmatprep.subr.bf16.mxu0 %v989
    %1247 = vmatpush2.bf16.msra.mxu0 %v988
    %1248 = vmatprep.subr.bf16.mxu0 %v979
    %1249 = vmatpush2.bf16.msra.mxu0 %v978
    %1250 = vmatprep.mubr.bf16.mxu0 %v203
    %1251 = vmatmul.mubr.bf16.gmra.mxu0 %v202
    %v1252 = vpop.f32.mrf.mxu0
    %v1253 = vadd.f32 %v371, %v1252
    %v1254 = vpop.f32.mrf.mxu0
    %v1255 = vadd.f32 %v375, %v1254
    %v1256 = vpop.f32.mrf.mxu0
    %v1257 = vpop.f32.mrf.mxu0
    %1258 = vdwg.mxu0
    %1259 = vmatprep.subr.bf16.mxu0 %v971
    %1260 = vmatpush1.bf16.msra.mxu0 %v970
    %1261 = vmatprep.subr.bf16.mxu0 %v961
    %1262 = vmatpush1.bf16.msra.mxu0 %v960
    %1263 = vmatprep.subr.bf16.mxu0 %v951
    %1264 = vmatpush1.bf16.msra.mxu0 %v950
    %1265 = vmatprep.subr.bf16.mxu0 %v941
    %1266 = vmatpush1.bf16.msra.mxu0 %v940
    %1267 = vmatprep.subr.bf16.mxu0 %v931
    %1268 = vmatpush1.bf16.msra.mxu0 %v930
    %1269 = vmatprep.subr.bf16.mxu0 %v921
    %1270 = vmatpush1.bf16.msra.mxu0 %v920
    %1271 = vmatprep.subr.bf16.mxu0 %v911
    %1272 = vmatpush1.bf16.msra.mxu0 %v910
    %1273 = vmatprep.subr.bf16.mxu0 %v901
    %1274 = vmatpush1.bf16.msra.mxu0 %v900
    %1275 = vmatprep.subr.bf16.mxu0 %v1051
    %1276 = vmatpush2.bf16.msra.mxu0 %v1050
    %1277 = vmatprep.subr.bf16.mxu0 %v1041
    %1278 = vmatpush2.bf16.msra.mxu0 %v1040
    %1279 = vmatprep.subr.bf16.mxu0 %v1031
    %1280 = vmatpush2.bf16.msra.mxu0 %v1030
    %1281 = vmatprep.subr.bf16.mxu0 %v1021
    %1282 = vmatpush2.bf16.msra.mxu0 %v1020
    %1283 = vmatprep.subr.bf16.mxu0 %v1011
    %1284 = vmatpush2.bf16.msra.mxu0 %v1010
    %1285 = vmatprep.subr.bf16.mxu0 %v1001
    %1286 = vmatpush2.bf16.msra.mxu0 %v1000
    %1287 = vmatprep.subr.bf16.mxu0 %v991
    %1288 = vmatpush2.bf16.msra.mxu0 %v990
    %1289 = vmatprep.subr.bf16.mxu0 %v981
    %1290 = vmatpush2.bf16.msra.mxu0 %v980
    %1291 = vmatprep.mubr.bf16.mxu0 %v203
    %1292 = vmatmul.mubr.bf16.gmra.mxu0 %v202
    %v1293 = vpop.f32.mrf.mxu0
    %v1294 = vadd.f32 %v379, %v1293
    %v1295 = vpop.f32.mrf.mxu0
    %v1296 = vadd.f32 %v383, %v1295
    %v1297 = vpop.f32.mrf.mxu0
    %v1298 = vpop.f32.mrf.mxu0
    %1299 = vdwg.mxu0
    %1300 = vmatprep.subr.bf16.mxu0 %v973
    %1301 = vmatpush1.bf16.msra.mxu0 %v972
    %1302 = vmatprep.subr.bf16.mxu0 %v963
    %1303 = vmatpush1.bf16.msra.mxu0 %v962
    %1304 = vmatprep.subr.bf16.mxu0 %v953
    %1305 = vmatpush1.bf16.msra.mxu0 %v952
    %1306 = vmatprep.subr.bf16.mxu0 %v943
    %1307 = vmatpush1.bf16.msra.mxu0 %v942
    %1308 = vmatprep.subr.bf16.mxu0 %v933
    %1309 = vmatpush1.bf16.msra.mxu0 %v932
    %1310 = vmatprep.subr.bf16.mxu0 %v923
    %1311 = vmatpush1.bf16.msra.mxu0 %v922
    %1312 = vmatprep.subr.bf16.mxu0 %v913
    %1313 = vmatpush1.bf16.msra.mxu0 %v912
    %1314 = vmatprep.subr.bf16.mxu0 %v903
    %1315 = vmatpush1.bf16.msra.mxu0 %v902
    %1316 = vmatprep.subr.bf16.mxu0 %v1053
    %1317 = vmatpush2.bf16.msra.mxu0 %v1052
    %1318 = vmatprep.subr.bf16.mxu0 %v1043
    %1319 = vmatpush2.bf16.msra.mxu0 %v1042
    %1320 = vmatprep.subr.bf16.mxu0 %v1033
    %1321 = vmatpush2.bf16.msra.mxu0 %v1032
    %1322 = vmatprep.subr.bf16.mxu0 %v1023
    %1323 = vmatpush2.bf16.msra.mxu0 %v1022
    %1324 = vmatprep.subr.bf16.mxu0 %v1013
    %1325 = vmatpush2.bf16.msra.mxu0 %v1012
    %1326 = vmatprep.subr.bf16.mxu0 %v1003
    %1327 = vmatpush2.bf16.msra.mxu0 %v1002
    %1328 = vmatprep.subr.bf16.mxu0 %v993
    %1329 = vmatpush2.bf16.msra.mxu0 %v992
    %1330 = vmatprep.subr.bf16.mxu0 %v983
    %1331 = vmatpush2.bf16.msra.mxu0 %v982
    %1332 = vmatprep.mubr.bf16.mxu0 %v203
    %1333 = vmatmul.mubr.bf16.gmra.mxu0 %v202
    %v1334 = vpop.f32.mrf.mxu0
    %v1335 = vadd.f32 %v387, %v1334
    %v1336 = vpop.f32.mrf.mxu0
    %v1337 = vadd.f32 %v391, %v1336
    %v1338 = vpop.f32.mrf.mxu0
    %v1339 = vpop.f32.mrf.mxu0
    %1340 = vdwg.mxu0
    %1341 = vmatprep.subr.bf16.mxu0 %v975
    %1342 = vmatpush1.bf16.msra.mxu0 %v974
    %1343 = vmatprep.subr.bf16.mxu0 %v965
    %1344 = vmatpush1.bf16.msra.mxu0 %v964
    %1345 = vmatprep.subr.bf16.mxu0 %v955
    %1346 = vmatpush1.bf16.msra.mxu0 %v954
    %1347 = vmatprep.subr.bf16.mxu0 %v945
    %1348 = vmatpush1.bf16.msra.mxu0 %v944
    %1349 = vmatprep.subr.bf16.mxu0 %v935
    %1350 = vmatpush1.bf16.msra.mxu0 %v934
    %1351 = vmatprep.subr.bf16.mxu0 %v925
    %1352 = vmatpush1.bf16.msra.mxu0 %v924
    %1353 = vmatprep.subr.bf16.mxu0 %v915
    %1354 = vmatpush1.bf16.msra.mxu0 %v914
    %1355 = vmatprep.subr.bf16.mxu0 %v905
    %1356 = vmatpush1.bf16.msra.mxu0 %v904
    %1357 = vmatprep.subr.bf16.mxu0 %v1055
    %1358 = vmatpush2.bf16.msra.mxu0 %v1054
    %1359 = vmatprep.subr.bf16.mxu0 %v1045
    %1360 = vmatpush2.bf16.msra.mxu0 %v1044
    %1361 = vmatprep.subr.bf16.mxu0 %v1035
    %1362 = vmatpush2.bf16.msra.mxu0 %v1034
    %1363 = vmatprep.subr.bf16.mxu0 %v1025
    %1364 = vmatpush2.bf16.msra.mxu0 %v1024
    %1365 = vmatprep.subr.bf16.mxu0 %v1015
    %1366 = vmatpush2.bf16.msra.mxu0 %v1014
    %1367 = vmatprep.subr.bf16.mxu0 %v1005
    %1368 = vmatpush2.bf16.msra.mxu0 %v1004
    %1369 = vmatprep.subr.bf16.mxu0 %v995
    %1370 = vmatpush2.bf16.msra.mxu0 %v994
    %1371 = vmatprep.subr.bf16.mxu0 %v985
    %1372 = vmatpush2.bf16.msra.mxu0 %v984
    %1373 = vmatprep.mubr.bf16.mxu0 %v203
    %1374 = vmatmul.mubr.bf16.gmra.mxu0 %v202
    %v1375 = vpop.f32.mrf.mxu0
    %v1376 = vadd.f32 %v395, %v1375
    %v1377 = vpop.f32.mrf.mxu0
    %v1378 = vadd.f32 %v399, %v1377
    %v1379 = vpop.f32.mrf.mxu0
    %v1380 = vpop.f32.mrf.mxu0
    %1381 = vdwg.mxu0
    %1382 = vmatprep.subr.bf16.mxu0 %v977
    %1383 = vmatpush1.bf16.msra.mxu0 %v976
    %1384 = vmatprep.subr.bf16.mxu0 %v967
    %1385 = vmatpush1.bf16.msra.mxu0 %v966
    %1386 = vmatprep.subr.bf16.mxu0 %v957
    %1387 = vmatpush1.bf16.msra.mxu0 %v956
    %1388 = vmatprep.subr.bf16.mxu0 %v947
    %1389 = vmatpush1.bf16.msra.mxu0 %v946
    %1390 = vmatprep.subr.bf16.mxu0 %v937
    %1391 = vmatpush1.bf16.msra.mxu0 %v936
    %1392 = vmatprep.subr.bf16.mxu0 %v927
    %1393 = vmatpush1.bf16.msra.mxu0 %v926
    %1394 = vmatprep.subr.bf16.mxu0 %v917
    %1395 = vmatpush1.bf16.msra.mxu0 %v916
    %1396 = vmatprep.subr.bf16.mxu0 %v907
    %1397 = vmatpush1.bf16.msra.mxu0 %v906
    %1398 = vmatprep.subr.bf16.mxu0 %v1057
    %1399 = vmatpush2.bf16.msra.mxu0 %v1056
    %1400 = vmatprep.subr.bf16.mxu0 %v1047
    %1401 = vmatpush2.bf16.msra.mxu0 %v1046
    %1402 = vmatprep.subr.bf16.mxu0 %v1037
    %1403 = vmatpush2.bf16.msra.mxu0 %v1036
    %1404 = vmatprep.subr.bf16.mxu0 %v1027
    %1405 = vmatpush2.bf16.msra.mxu0 %v1026
    %1406 = vmatprep.subr.bf16.mxu0 %v1017
    %1407 = vmatpush2.bf16.msra.mxu0 %v1016
    %1408 = vmatprep.subr.bf16.mxu0 %v1007
    %1409 = vmatpush2.bf16.msra.mxu0 %v1006
    %1410 = vmatprep.subr.bf16.mxu0 %v997
    %1411 = vmatpush2.bf16.msra.mxu0 %v996
    %1412 = vmatprep.subr.bf16.mxu0 %v987
    %1413 = vmatpush2.bf16.msra.mxu0 %v986
    %1414 = vmatprep.mubr.bf16.mxu0 %v203
    %1415 = vmatmul.mubr.bf16.gmra.mxu0 %v202
    %v1416 = vpop.f32.mrf.mxu0
    %v1417 = vadd.f32 %v403, %v1416
    %v1418 = vpop.f32.mrf.mxu0
    %v1419 = vadd.f32 %v407, %v1418
    %v1420 = vpop.f32.mrf.mxu0
    %v1421 = vpop.f32.mrf.mxu0
    %1422 = vdwg.mxu0
    %v1423 = vsub.f32 0.0, %v1253
    %v1424 = vsub.f32 0.0, %v1255
    %v1425 = vsub.f32 0.0, %v1294
    %v1426 = vsub.f32 0.0, %v1296
    %v1427 = vsub.f32 0.0, %v1335
    %v1428 = vsub.f32 0.0, %v1337
    %v1429 = vsub.f32 0.0, %v1376
    %v1430 = vsub.f32 0.0, %v1378
    %v1431 = vsub.f32 0.0, %v1417
    %v1432 = vsub.f32 0.0, %v1419
    %v1433 = vmul.f32 %v1423, 1.442695
    %v1434 = vpow.pop %v1433
    %v1435 = vmul.f32 %v1424, 1.442695
    %v1436 = vpow.pop %v1435
    %v1437 = vmul.f32 %v1425, 1.442695
    %v1438 = vpow.pop %v1437
    %v1439 = vmul.f32 %v1426, 1.442695
    %v1440 = vpow.pop %v1439
    %v1441 = vmul.f32 %v1427, 1.442695
    %v1442 = vpow.pop %v1441
    %v1443 = vmul.f32 %v1428, 1.442695
    %v1444 = vpow.pop %v1443
    %v1445 = vmul.f32 %v1429, 1.442695
    %v1446 = vpow.pop %v1445
    %v1447 = vmul.f32 %v1430, 1.442695
    %v1448 = vpow.pop %v1447
    %v1449 = vmul.f32 %v1431, 1.442695
    %v1450 = vpow.pop %v1449
    %v1451 = vmul.f32 %v1432, 1.442695
    %v1452 = vpow.pop %v1451
    %v1453 = vadd.f32 %v1434, 1.0
    %v1454 = vadd.f32 %v1436, 1.0
    %v1455 = vadd.f32 %v1438, 1.0
    %v1456 = vadd.f32 %v1440, 1.0
    %v1457 = vadd.f32 %v1442, 1.0
    %v1458 = vadd.f32 %v1444, 1.0
    %v1459 = vadd.f32 %v1446, 1.0
    %v1460 = vadd.f32 %v1448, 1.0
    %v1461 = vadd.f32 %v1450, 1.0
    %v1462 = vadd.f32 %v1452, 1.0
    %v1463 = vrcp.pop %v1453
    %v1464 = vmul.f32 1.0, %v1463
    %v1465 = vrcp.pop %v1454
    %v1466 = vmul.f32 1.0, %v1465
    %v1467 = vrcp.pop %v1455
    %v1468 = vmul.f32 1.0, %v1467
    %v1469 = vrcp.pop %v1456
    %v1470 = vmul.f32 1.0, %v1469
    %v1471 = vrcp.pop %v1457
    %v1472 = vmul.f32 1.0, %v1471
    %v1473 = vrcp.pop %v1458
    %v1474 = vmul.f32 1.0, %v1473
    %v1475 = vrcp.pop %v1459
    %v1476 = vmul.f32 1.0, %v1475
    %v1477 = vrcp.pop %v1460
    %v1478 = vmul.f32 1.0, %v1477
    %v1479 = vrcp.pop %v1461
    %v1480 = vmul.f32 1.0, %v1479
    %v1481 = vrcp.pop %v1462
    %v1482 = vmul.f32 1.0, %v1481
    %1483 = vst [vmem:[#allocation7] sm:$0xff] %v1464
    %1484 = vst [vmem:[#allocation7 + $0x8] sm:$0xff] %v1466
    %1485 = vst [vmem:[#allocation7 + $0x10] sm:$0xff] %v1468
    %1486 = vst [vmem:[#allocation7 + $0x18] sm:$0xff] %v1470
    %1487 = vst [vmem:[#allocation7 + $0x20] sm:$0xff] %v1472
    %1488 = vst [vmem:[#allocation7 + $0x28] sm:$0xff] %v1474
    %1489 = vst [vmem:[#allocation7 + $0x30] sm:$0xff] %v1476
    %1490 = vst [vmem:[#allocation7 + $0x38] sm:$0xff] %v1478
    %1491 = vst [vmem:[#allocation7 + $0x40] sm:$0xff] %v1480
    %vm1492 = vcmask 801792
    %1493 = vst.msk [vmem:[#allocation7 + $0x48] sm:$0xff] %vm1492, %v1482
    // Predicated region
    $region30: #{simple2nn_forward.1} parent=1 // pred_check
      _
    $region31: #{simple2nn_forward.1} parent=1 // pred_check_branch
      %1495 = sbr.rel (0) target = $region33
    $region32: #{simple2nn_forward.1} parent=1 // pred_region
      %s1497 = ssub.s32 1280, 1280
      %1498 = vsyncadd [#allocation4], %s1497
      %s1500 = sshll.u32 [#allocation7], 4
      %s1501 = int_to_ptr.vmem [resolvable:$true] %s1500
      %1503 = dma.vmem_to_hbm [thread:$0]  %s1501, 1280, %s5, [#allocation4]
    $region33: #{simple2nn_forward.1} parent=1 // pred_fallthru
      _
    // Predicated region
    $region34: #{simple2nn_forward.1} parent=1 // pred_check
      _
    $region35: #{simple2nn_forward.1} parent=1 // pred_check_branch
      %1505 = sbr.rel (0) target = $region37
    $region36: #{simple2nn_forward.1} parent=1 // pred_region
      %1506 = dma.done [#allocation4], 1280
    $region37: #{simple2nn_forward.1} parent=1 // pred_fallthru
      _
    %1507 = vsyncpa [#allocation3], 1
    %1508 = vsyncpa [#allocation6], 1
    %1509 = vsyncpa [#allocation4], 1

</llo_original>
